<compile_context>
chip_gen: v6e
topology: v6e:2x2x1
jax: 0.10.0
libtpu: 0.0.40
codegen_flags: <defaults>
</compile_context>

<pallas_src>
import math

import jax
import jax.numpy as jnp
from jax import lax
from jax.experimental import pallas as pl
from jax.experimental.pallas import tpu as pltpu


def _append_zeros_kernel(x_ref, o_ref):
    """x_ref: (ts, H) VMEM block; o_ref: (ts, T) VMEM block, T > H.

    Output stores are split at the last 128-lane boundary below H so that
    every store is lane-aligned except (unavoidably) the array edge:
      [0 : Ha)       lane-aligned slab copy          (Ha = floor(H/128)*128)
      [Ha : Ha+bw)   one full-lane boundary block: tail ++ zeros
      [Ha+bw : T)    lane-aligned zero fill
    """
    rows = x_ref.shape[0]
    H = x_ref.shape[-1]
    T = o_ref.shape[-1]
    h_aligned = (H // 128) * 128
    rem = H - h_aligned

    if rem == 0:
        # Copy/zero boundary already lane-aligned: two direct slab stores,
        # no vreg-materializing concat of the full (ts, T) tile.
        o_ref[:, :H] = x_ref[...]
        o_ref[:, H:] = jnp.zeros((rows, T - H), dtype=o_ref.dtype)
    else:
        if h_aligned > 0:
            o_ref[:, :h_aligned] = x_ref[:, :h_aligned]
        # Ragged boundary block: build a full-width value in vregs and do one
        # lane-aligned store instead of a masked partial store at offset H.
        bw = min(128, T - h_aligned)          # boundary block width (> rem)
        tail = x_ref[:, h_aligned:]           # (rows, rem)
        tail = jnp.concatenate(
            [tail, jnp.zeros((rows, bw - rem), dtype=o_ref.dtype)], axis=-1
        )
        o_ref[:, h_aligned:h_aligned + bw] = tail
        if T > h_aligned + bw:
            o_ref[:, h_aligned + bw:] = jnp.zeros(
                (rows, T - h_aligned - bw), dtype=o_ref.dtype
            )


def _vmem_block_budget_bytes():
    """Generation-aware budget for live (double-buffered) blocks."""
    try:
        vmem_cap = pltpu.get_tpu_info().vmem_capacity_bytes
    except Exception:
        vmem_cap = 64 << 20  # be conservative (v7x-like) if query fails
    if vmem_cap >= (100 << 20):   # v5e / v6e: 128 MiB VMEM
        return 48 << 20
    return 22 << 20               # v7x: 64 MiB VMEM per TC


def _choose_row_tile(R, H, T, itemsize):
    """Row-tile ts (multiple of 32 sublanes, covers f32/bf16/int8 packing)."""
    budget = _vmem_block_budget_bytes()
    # Live VMEM per row: 2 input buffers * H + 2 output buffers * T.
    bytes_per_row = 2 * (H + T) * itemsize
    max_ts = budget // max(1, bytes_per_row)
    max_ts = max(32, (max_ts // 32) * 32)

    if R <= 32:
        return R  # full-extent block dim is always legal

    # Guarantee >= 4 grid steps when rows allow it: 2 per v7x TensorCore and
    # enough steps for read-prefetch / writeback overlap on every generation.
    min_steps = 4
    ts_for_steps = -(-R // min_steps)                      # ceil(R / 4)
    ts_for_steps = max(32, ((ts_for_steps + 31) // 32) * 32)
    ts = min(max_ts, ts_for_steps, R)
    if ts != R:
        ts = max(32, (ts // 32) * 32)

    # Prefer a tile that divides R exactly (no ragged last tile -> no masked
    # partial writeback), searching a factor of ~2 below among 32-multiples.
    if R % ts != 0:
        for cand in range(ts, max(31, ts // 2), -32):
            if cand > 0 and R % cand == 0:
                ts = cand
                break
    return ts


def _append_zeros_last_axis(x2d, target_hidden_size):
    """x2d: [R, H] -> [R, T] with zero padding on the last (lane) axis."""
    R, H = x2d.shape
    T = int(target_hidden_size)
    itemsize = jnp.dtype(x2d.dtype).itemsize

    ts = _choose_row_tile(R, H, T, itemsize)
    n_r = pl.cdiv(R, ts)

    live_bytes = ts * 2 * (H + T) * itemsize        # double-buffered in + out
    vmem_limit = int(max(16 << 20, live_bytes + (4 << 20)))

    cost = pl.CostEstimate(
        flops=0,
        transcendentals=0,
        bytes_accessed=R * (H + T) * itemsize,
    )

    return pl.pallas_call(
        _append_zeros_kernel,
        out_shape=jax.ShapeDtypeStruct((R, T), x2d.dtype),
        grid_spec=pltpu.PrefetchScalarGridSpec(
            num_scalar_prefetch=0,
            grid=(n_r,),
            in_specs=[pl.BlockSpec((ts, H), lambda r: (r, 0))],
            out_specs=pl.BlockSpec((ts, T), lambda r: (r, 0)),
        ),
        compiler_params=pltpu.CompilerParams(
            dimension_semantics=("parallel",),
            vmem_limit_bytes=vmem_limit,
        ),
        cost_estimate=cost,
    )(x2d)


def _xla_pad(x, dim, d_res):
    cfg = [(0, 0, 0)] * x.ndim
    cfg[dim] = (0, d_res, 0)
    return lax.pad(x, jnp.zeros((), dtype=x.dtype), cfg)


def append_zeros_to_hidden(x, target_hidden_size, dim, *, materialize=True):
    """JAX/Pallas equivalent of AppendZerosToHidden(target_hidden_size, dim).

    materialize=False routes through lax.pad so XLA can fuse the pad into the
    consumer (skips the extra HBM round trip when the result is consumed
    immediately, e.g. fed straight into a matmul).
    """
    ndim = x.ndim
    dim = dim % ndim
    H = x.shape[dim]
    T = int(target_hidden_size)
    d_res = T - H
    assert d_res >= 0, "target_hidden_size must be >= current size along dim"
    if d_res == 0:
        return x
    if not materialize:
        return _xla_pad(x, dim, d_res)

    # Non-minor pad axis: no data reordering is needed at all, so a single
    # lax.pad beats a moveaxis round-trip around a lane-axis kernel.
    # TODO(synk): pure-Pallas path for non-minor pad axes via block bookkeeping.
    if dim != ndim - 1:
        return _xla_pad(x, dim, d_res)

    # Tiny or lane-narrow outputs: pallas_call launch + masked partial stores
    # dominate the copy; XLA pad is strictly faster there.
    total_out = (math.prod(x.shape[:-1]) if ndim > 1 else 1) * T
    if T < 128 or total_out < 65536:
        return _xla_pad(x, dim, d_res)

    # Collapse ALL leading axes into one row axis (layout-preserving reshape).
    R = math.prod(x.shape[:-1]) if ndim > 1 else 1
    x2d = x.reshape(R, H)
    out2d = _append_zeros_last_axis(x2d, T)
    return out2d.reshape(x.shape[:-1] + (T,))


def _reference(x, target_hidden_size, dim):
    d_res = target_hidden_size - x.shape[dim]
    shape = list(x.shape)
    shape[dim % x.ndim] = d_res
    return jnp.concatenate([x, jnp.zeros(tuple(shape), dtype=x.dtype)], axis=dim)


if __name__ == "__main__":
    key = jax.random.PRNGKey(0)
    k1, k2, k3, k4 = jax.random.split(key, 4)

    # 1) Pallas path, lane-aligned H: [2, 256, 128] -> hidden 384, dim=-1.
    B, S, H = 2, 256, 128
    T = 384
    x = jax.random.normal(k1, (B, S, H), dtype=jnp.float32)
    out = jax.block_until_ready(append_zeros_to_hidden(x, T, -1))
    assert out.shape == (B, S, T) and out.dtype == x.dtype
    assert jnp.array_equal(out, _reference(x, T, -1)), "mismatch (aligned path)"

    # 2) Pallas path, ragged rows AND unaligned H: [3, 300, 100] -> 256.
    #    Exercises the lane-boundary split and the masked last row tile.
    x_rag = jax.random.normal(k2, (3, 300, 100), dtype=jnp.float32)
    out_rag = jax.block_until_ready(append_zeros_to_hidden(x_rag, 256, -1))
    assert jnp.array_equal(out_rag, _reference(x_rag, 256, -1)), "mismatch (ragged path)"

    # 3) Tiny-shape fallback path: [2, 8, 32] -> hidden 64.
    x_small = jax.random.normal(k3, (2, 8, 32), dtype=jnp.float32)
    out_small = jax.block_until_ready(append_zeros_to_hidden(x_small, 64, -1))
    assert jnp.array_equal(out_small, _reference(x_small, 64, -1))

    # 4) Non-minor pad axis fallback: pad dim=1 of [2, 8, 32] to 16.
    x_mid = jax.random.normal(k4, (2, 8, 32), dtype=jnp.float32)
    out_mid = jax.block_until_ready(append_zeros_to_hidden(x_mid, 16, 1))
    assert jnp.array_equal(out_mid, _reference(x_mid, 16, 1))

    print("KERNEL_OK")
</pallas_src>

<mosaic_0001>
module attributes {stable_mosaic.version = 11 : i64} {
  func.func @_append_zeros_kernel(%arg0: i32, %arg1: memref<128x128xf32, #tpu.memory_space<vmem>>, %arg2: memref<128x384xf32, #tpu.memory_space<vmem>>) attributes {dimension_semantics = [#tpu.dimension_semantics<parallel>], iteration_bounds = array<i64: 4>, scalar_prefetch = 0 : i64, scratch_operands = 0 : i64, tpu.core_type = #tpu.core_type<tc>, window_params = [{transform_indices = @transform_0, window_bounds = array<i64: 128, 128>}, {transform_indices = @transform_1, window_bounds = array<i64: 128, 384>}]} {
    %c0 = arith.constant 0 : index
    %c0_0 = arith.constant 0 : index
    %0 = vector.load %arg1[%c0, %c0_0] : memref<128x128xf32, #tpu.memory_space<vmem>>, vector<128x128xf32>
    %c0_1 = arith.constant 0 : index
    %c0_2 = arith.constant 0 : index
    %1 = vector.load %arg2[%c0_1, %c0_2] : memref<128x384xf32, #tpu.memory_space<vmem>>, vector<128x128xf32>
    tpu.vector_store %arg2[%c0_1, %c0_2], %0 {strides = array<i32>} : memref<128x384xf32, #tpu.memory_space<vmem>>, vector<128x128xf32>,
    %cst = arith.constant 0.000000e+00 : f32
    %2 = vector.broadcast %cst : f32 to vector<128x256xf32>
    %c0_3 = arith.constant 0 : index
    %c128 = arith.constant 128 : index
    %3 = vector.load %arg2[%c0_3, %c128] : memref<128x384xf32, #tpu.memory_space<vmem>>, vector<128x256xf32>
    tpu.vector_store %arg2[%c0_3, %c128], %2 {strides = array<i32>} : memref<128x384xf32, #tpu.memory_space<vmem>>, vector<128x256xf32>,
    return
  }
  func.func @transform_0(%arg0: i32) -> (i32, i32) {
    %c0_i32 = arith.constant 0 : i32
    %c0_i32_0 = arith.constant 0 : i32
    return %arg0, %c0_i32 : i32, i32
  }
  func.func @transform_1(%arg0: i32) -> (i32, i32) {
    %c0_i32 = arith.constant 0 : i32
    %c0_i32_0 = arith.constant 0 : i32
    return %arg0, %c0_i32 : i32, i32
  }
}

</mosaic_0001>

<llo_original>
// kernel: tpu_custom_call.1
$region0: #{tpu_custom_call.1}
  #allocation0 [shape = 'u32[]', space=smem, size = 0x4, offset = 0x4, fixed_abs, tag = 'smem constant byte address 0x4 - core index']
  #allocation1 [shape = 'u32[144,128]{1,0:T(1,128)}', space=vmem, size = 0x12000, scoped, tag = 'internal scratch']
  %s0 = inlined_call_operand.hbm [shape: f32[512,128], index: 0, kind: input, shape index: {}]
  %s1 = inlined_call_operand.hbm [shape: f32[512,384], index: 1, kind: output, shape index: {}]
  %s2 = sld [smem:[#allocation0]]
  $region41: #{tpu_custom_call.1} parent=0
    _
  %s4 = ssub.s32 1, %s2
  %s5 = scalar_select 0, %s4, %s2
  $region1: #{tpu_custom_call.1} parent=0
    #allocation2 [shape = 'u8[131072]{0}', space=vmem, size = 0x20000, scoped, tag = 'input window, operand 0']
    #allocation3 [shape = 's32[2]{0}', space=sflag, size = 0x8, scoped, tag = 'scoped memory for tpu_custom_call.1']
    #allocation4 [shape = 's32[2]{0}', space=sflag, size = 0x8, scoped, tag = 'scoped memory for tpu_custom_call.1']
    #allocation5 [shape = 'u8[393216]{0}', space=vmem, size = 0x60000, scoped, tag = 'output window, operand 0']
    %6 = vsyncpa [#allocation3], 0
    %s7 = scalar_lea.sflag [#allocation3], 1
    %8 = vsyncpa %s7, 0
    %9 = vsyncpa [#allocation4], 0
    %s10 = scalar_lea.sflag [#allocation4], 1
    %11 = vsyncpa %s10, 0
    loop: start=0, step=1, limit=6
    $region2: #{tpu_custom_call.1} parent=1 // loop_pre_header
      _
    $region3: #{tpu_custom_call.1} parent=1 // loop_header
      %s13 = sphi 0, %s17
      %p14 = scmp.ge.s32.totalorder %s13, 6
      %s23 = sphi 0, %s25
      %s26 = sphi 0, %s23
      %s27 = sphi 0, %s26
      %s43 = sphi 0, %s27
      %s49 = sphi 0, %s51
      %s52 = sphi 0, %s49
      %s53 = sphi 0, %s52
      %s69 = sphi 0, %s53
    $region4: #{tpu_custom_call.1} parent=1 // loop_header_branch
      %16 = sbr.rel (%p14) target = $region8
    $region5: #{tpu_custom_call.1} parent=1 // loop_body
      %s18 = ssub.s32 %s13, 1
      %s19 = ssub.s32 %s13, 2
      %s20 = sadd.s32 %s13, 1
      %s21 = ssub.s32 %s13, %s20
      %p22 = scmp.eq.s32.totalorder %s21, 0
      %s24 = sadd.s32 %s23, 1
      %s25 = scalar_select %p22, %s23, %s24
      %p28 = pneg %p22
      %p29 = scmp.eq.s32.totalorder %s13, 3
      %p30 = por %p28, %p29
      %p31 = scmp.ne.s32.totalorder %s23, %s26
      %p32 = scmp.eq.s32.totalorder %s13, 0
      %p33 = por %p31, %p32
      %p34 = scmp.ne.s32.totalorder %s23, %s26
      %p35 = scmp.eq.s32.totalorder %s18, 3
      %p36 = por %p34, %p35
      %p37 = scmp.ne.s32.totalorder %s26, %s27
      %p38 = scmp.eq.s32.totalorder %s18, 0
      %p39 = por %p37, %p38
      %p40 = scmp.ne.s32.totalorder %s26, %s27
      %p41 = scmp.eq.s32.totalorder %s19, 3
      %p42 = por %p40, %p41
      %p44 = scmp.ne.s32.totalorder %s27, %s43
      %p45 = scmp.eq.s32.totalorder %s19, 0
      %p46 = por %p44, %p45
      %s47 = ssub.s32 %s13, %s20
      %p48 = scmp.eq.s32.totalorder %s47, 0
      %s50 = sadd.s32 %s49, 1
      %s51 = scalar_select %p48, %s49, %s50
      %p54 = pneg %p48
      %p55 = scmp.eq.s32.totalorder %s13, 3
      %p56 = por %p54, %p55
      %p57 = scmp.ne.s32.totalorder %s49, %s52
      %p58 = scmp.eq.s32.totalorder %s13, 0
      %p59 = por %p57, %p58
      %p60 = scmp.ne.s32.totalorder %s49, %s52
      %p61 = scmp.eq.s32.totalorder %s18, 3
      %p62 = por %p60, %p61
      %p63 = scmp.ne.s32.totalorder %s52, %s53
      %p64 = scmp.eq.s32.totalorder %s18, 0
      %p65 = por %p63, %p64
      %p66 = scmp.ne.s32.totalorder %s52, %s53
      %p67 = scmp.eq.s32.totalorder %s19, 3
      %p68 = por %p66, %p67
      %p70 = scmp.ne.s32.totalorder %s53, %s69
      %p71 = scmp.eq.s32.totalorder %s19, 0
      %p72 = por %p70, %p71
      %p73 = scmp.le.s32.totalorder 1, %s13
      %p74 = scmp.lt.s32.totalorder %s13, 5
      %p75 = pnand %p73, %p74
      %p76 = pneg %p75
      // Predicated region
      $region9: #{tpu_custom_call.1} parent=5 // pred_check
        _
      $region10: #{tpu_custom_call.1} parent=5 // pred_check_branch
        %78 = sbr.rel (%p75) target = $region12
      $region11: #{tpu_custom_call.1} parent=5 // pred_region
        %s79 = ssub.s32 %s13, 1
      $region12: #{tpu_custom_call.1} parent=5 // pred_fallthru
        _
      %p80 = scmp.lt.s32.totalorder %s13, 4
      // Predicated region
      $region13: #{tpu_custom_call.1} parent=5 // pred_check
        %p81 = pneg %p80
      $region14: #{tpu_custom_call.1} parent=5 // pred_check_branch
        %83 = sbr.rel (%p81) target = $region16
      $region15: #{tpu_custom_call.1} parent=5 // pred_region
        // Predicated region
        $region17: #{tpu_custom_call.1} parent=15 // pred_check
          %p84 = pneg %p33
        $region18: #{tpu_custom_call.1} parent=15 // pred_check_branch
          %86 = sbr.rel (%p84) target = $region20
        $region19: #{tpu_custom_call.1} parent=15 // pred_region
          %s87 = sand.u32 %s23, 1
          %s88 = scalar_lea.sflag [#allocation3], %s87
          %s89 = sand.u32 %s23, 1
          %s90 = smul.addr %s89, 128
          %s91 = scalar_lea.vmem [#allocation2], %s90
          %s92 = smul.u32 16, %s13
          %s94 = ssub.s32 2048, 2048
          %95 = vsyncadd %s88, %s94
          %s96 = smul.addr %s92, 128
          %s97 = scalar_lea.hbm %s0, %s96
          %s98 = sshll.u32 %s91, 4
          %s99 = int_to_ptr.vmem [resolvable:$true] %s98
          %104 = dma.hbm_to_vmem [thread:$0]  %s97, 2048, %s99, %s88, 128, 128, 8
        $region20: #{tpu_custom_call.1} parent=15 // pred_fallthru
          _
      $region16: #{tpu_custom_call.1} parent=5 // pred_fallthru
        _
      %p105 = scmp.le.s32.totalorder 1, %s13
      %p106 = scmp.lt.s32.totalorder %s13, 5
      %p107 = pnand %p105, %p106
      %p108 = pneg %p107
      // Predicated region
      $region21: #{tpu_custom_call.1} parent=5 // pred_check
        _
      $region22: #{tpu_custom_call.1} parent=5 // pred_check_branch
        %110 = sbr.rel (%p107) target = $region24
      $region23: #{tpu_custom_call.1} parent=5 // pred_region
        %s111 = ssub.s32 %s13, 1
        %s112 = sand.u32 %s26, 1
        %s113 = scalar_lea.sflag [#allocation3], %s112
        %s114 = sand.u32 %s26, 1
        %s115 = smul.addr %s114, 128
        %s116 = scalar_lea.vmem [#allocation2], %s115
        // Predicated region
        $region25: #{tpu_custom_call.1} parent=23 // pred_check
          %p117 = pneg %p39
        $region26: #{tpu_custom_call.1} parent=23 // pred_check_branch
          %119 = sbr.rel (%p117) target = $region28
        $region27: #{tpu_custom_call.1} parent=23 // pred_region
          %120 = dma.done %s113, 2048
        $region28: #{tpu_custom_call.1} parent=23 // pred_fallthru
          _
        %s121 = sand.u32 %s26, 1
        %s122 = scalar_lea.sflag [#allocation3], %s121
        %s123 = sand.u32 %s26, 1
        %s124 = smul.addr %s123, 128
        %s125 = scalar_lea.vmem [#allocation2], %s124
        %p126 = pneg %p39
        %p127 = pneg %p36
        %p128 = pneg %p65
        %p129 = pneg %p62
        %s130 = sand.u32 %s52, 1
        %s131 = scalar_lea.sflag [#allocation4], %s130
        %s132 = sand.u32 %s52, 1
        %s133 = smul.addr %s132, 384
        %s134 = scalar_lea.vmem [#allocation5], %s133
        %s135 = smul.u32 16, %s18
        %s136 = smul.u32 16, %s18
        %v137 = vld [vmem:[%s116] sm:$0xff]
        %v138 = vld [vmem:[%s116 + $0x8] sm:$0xff]
        %v139 = vld [vmem:[%s116 + $0x10] sm:$0xff]
        %v140 = vld [vmem:[%s116 + $0x18] sm:$0xff]
        %v141 = vld [vmem:[%s116 + $0x20] sm:$0xff]
        %v142 = vld [vmem:[%s116 + $0x28] sm:$0xff]
        %v143 = vld [vmem:[%s116 + $0x30] sm:$0xff]
        %v144 = vld [vmem:[%s116 + $0x38] sm:$0xff]
        %v145 = vld [vmem:[%s116 + $0x40] sm:$0xff]
        %v146 = vld [vmem:[%s116 + $0x48] sm:$0xff]
        %v147 = vld [vmem:[%s116 + $0x50] sm:$0xff]
        %v148 = vld [vmem:[%s116 + $0x58] sm:$0xff]
        %v149 = vld [vmem:[%s116 + $0x60] sm:$0xff]
        %v150 = vld [vmem:[%s116 + $0x68] sm:$0xff]
        %v151 = vld [vmem:[%s116 + $0x70] sm:$0xff]
        %v152 = vld [vmem:[%s116 + $0x78] sm:$0xff]
        %153 = vst [vmem:[%s134] sm:$0xff] %v137
        %154 = vst [vmem:[%s134 + $0x18] sm:$0xff] %v138
        %155 = vst [vmem:[%s134 + $0x30] sm:$0xff] %v139
        %156 = vst [vmem:[%s134 + $0x48] sm:$0xff] %v140
        %157 = vst [vmem:[%s134 + $0x60] sm:$0xff] %v141
        %158 = vst [vmem:[%s134 + $0x78] sm:$0xff] %v142
        %159 = vst [vmem:[%s134 + $0x90] sm:$0xff] %v143
        %160 = vst [vmem:[%s134 + $0xa8] sm:$0xff] %v144
        %161 = vst [vmem:[%s134 + $0xc0] sm:$0xff] %v145
        %162 = vst [vmem:[%s134 + $0xd8] sm:$0xff] %v146
        %163 = vst [vmem:[%s134 + $0xf0] sm:$0xff] %v147
        %164 = vst [vmem:[%s134 + $0x108] sm:$0xff] %v148
        %165 = vst [vmem:[%s134 + $0x120] sm:$0xff] %v149
        %166 = vst [vmem:[%s134 + $0x138] sm:$0xff] %v150
        %167 = vst [vmem:[%s134 + $0x150] sm:$0xff] %v151
        %168 = vst [vmem:[%s134 + $0x168] sm:$0xff] %v152
        %169 = vst [vmem:[%s134 + $0x8] sm:$0xff] 0.0
        %170 = vst [vmem:[%s134 + $0x10] sm:$0xff] 0.0
        %171 = vst [vmem:[%s134 + $0x20] sm:$0xff] 0.0
        %172 = vst [vmem:[%s134 + $0x28] sm:$0xff] 0.0
        %173 = vst [vmem:[%s134 + $0x38] sm:$0xff] 0.0
        %174 = vst [vmem:[%s134 + $0x40] sm:$0xff] 0.0
        %175 = vst [vmem:[%s134 + $0x50] sm:$0xff] 0.0
        %176 = vst [vmem:[%s134 + $0x58] sm:$0xff] 0.0
        %177 = vst [vmem:[%s134 + $0x68] sm:$0xff] 0.0
        %178 = vst [vmem:[%s134 + $0x70] sm:$0xff] 0.0
        %179 = vst [vmem:[%s134 + $0x80] sm:$0xff] 0.0
        %180 = vst [vmem:[%s134 + $0x88] sm:$0xff] 0.0
        %181 = vst [vmem:[%s134 + $0x98] sm:$0xff] 0.0
        %182 = vst [vmem:[%s134 + $0xa0] sm:$0xff] 0.0
        %183 = vst [vmem:[%s134 + $0xb0] sm:$0xff] 0.0
        %184 = vst [vmem:[%s134 + $0xb8] sm:$0xff] 0.0
        %185 = vst [vmem:[%s134 + $0xc8] sm:$0xff] 0.0
        %186 = vst [vmem:[%s134 + $0xd0] sm:$0xff] 0.0
        %187 = vst [vmem:[%s134 + $0xe0] sm:$0xff] 0.0
        %188 = vst [vmem:[%s134 + $0xe8] sm:$0xff] 0.0
        %189 = vst [vmem:[%s134 + $0xf8] sm:$0xff] 0.0
        %190 = vst [vmem:[%s134 + $0x100] sm:$0xff] 0.0
        %191 = vst [vmem:[%s134 + $0x110] sm:$0xff] 0.0
        %192 = vst [vmem:[%s134 + $0x118] sm:$0xff] 0.0
        %193 = vst [vmem:[%s134 + $0x128] sm:$0xff] 0.0
        %194 = vst [vmem:[%s134 + $0x130] sm:$0xff] 0.0
        %195 = vst [vmem:[%s134 + $0x140] sm:$0xff] 0.0
        %196 = vst [vmem:[%s134 + $0x148] sm:$0xff] 0.0
        %197 = vst [vmem:[%s134 + $0x158] sm:$0xff] 0.0
        %198 = vst [vmem:[%s134 + $0x160] sm:$0xff] 0.0
        %199 = vst [vmem:[%s134 + $0x170] sm:$0xff] 0.0
        %200 = vst [vmem:[%s134 + $0x178] sm:$0xff] 0.0
        %s201 = sand.u32 %s52, 1
        %s202 = scalar_lea.sflag [#allocation4], %s201
        %s203 = sand.u32 %s52, 1
        %s204 = smul.addr %s203, 384
        %s205 = scalar_lea.vmem [#allocation5], %s204
        // Predicated region
        $region29: #{tpu_custom_call.1} parent=23 // pred_check
          %p206 = pneg %p62
        $region30: #{tpu_custom_call.1} parent=23 // pred_check_branch
          %208 = sbr.rel (%p206) target = $region32
        $region31: #{tpu_custom_call.1} parent=23 // pred_region
          %s209 = smul.u32 16, %s18
          %s211 = ssub.s32 6144, 6144
          %212 = vsyncadd %s202, %s211
          %s213 = smul.addr %s209, 3
          %s214 = smul.addr %s213, 128
          %s215 = scalar_lea.hbm %s1, %s214
          %s216 = sshll.u32 %s205, 4
          %s217 = int_to_ptr.vmem [resolvable:$true] %s216
          %222 = dma.vmem_to_hbm [thread:$0]  %s217, 6144, %s215, %s202, 384, 384, 24
        $region32: #{tpu_custom_call.1} parent=23 // pred_fallthru
          _
      $region24: #{tpu_custom_call.1} parent=5 // pred_fallthru
        _
      %p223 = scmp.le.s32.totalorder 2, %s13
      // Predicated region
      $region33: #{tpu_custom_call.1} parent=5 // pred_check
        %p224 = pneg %p223
      $region34: #{tpu_custom_call.1} parent=5 // pred_check_branch
        %226 = sbr.rel (%p224) target = $region36
      $region35: #{tpu_custom_call.1} parent=5 // pred_region
        %s227 = ssub.s32 %s13, 2
        // Predicated region
        $region37: #{tpu_custom_call.1} parent=35 // pred_check
          %p228 = pneg %p68
        $region38: #{tpu_custom_call.1} parent=35 // pred_check_branch
          %230 = sbr.rel (%p228) target = $region40
        $region39: #{tpu_custom_call.1} parent=35 // pred_region
          %s231 = sand.u32 %s53, 1
          %s232 = scalar_lea.sflag [#allocation4], %s231
          %s233 = sand.u32 %s53, 1
          %s234 = smul.addr %s233, 384
          %s235 = scalar_lea.vmem [#allocation5], %s234
          %236 = dma.done %s232, 6144
        $region40: #{tpu_custom_call.1} parent=35 // pred_fallthru
          _
      $region36: #{tpu_custom_call.1} parent=5 // pred_fallthru
        _
    $region6: #{tpu_custom_call.1} parent=1 // loop_footer
      %s17 = sadd.s32 1, %s13
    $region7: #{tpu_custom_call.1} parent=1 // loop_footer_branch
      %12 = sbr.rel target = $region3
    $region8: #{tpu_custom_call.1} parent=1 // loop_exit
      _
    %237 = vsyncpa [#allocation3], 1
    %s238 = scalar_lea.sflag [#allocation3], 1
    %239 = vsyncpa %s238, 1
    %240 = vsyncpa [#allocation4], 1
    %s241 = scalar_lea.sflag [#allocation4], 1
    %242 = vsyncpa %s241, 1

</llo_original>
